<compile_context>
chip_gen: v7x
topology: tpu7x:2x2x1
jax: 0.10.0
libtpu: 0.0.40
codegen_flags: <defaults>
</compile_context>

<pallas_src>
import jax
import jax.numpy as jnp
import numpy as np
from jax.experimental import pallas as pl
from jax.experimental.pallas import tpu as pltpu


def _topdown_attn_kernel(obj_ref, ques_ref, msk_ref, nobj_ref,
                         wg_obj_ref, wg_q_ref, bg_ref, wa_ref, ba_ref,
                         feat_out_ref, mask_out_ref, wt_out_ref):
    obj = obj_ref[...]                                   # (TB, O, F1)
    msk = msk_ref[...]                                   # (TB, O, HW)
    ques = ques_ref[...]                                 # (TB, F2)
    TB, O, F1 = obj.shape
    A = wg_obj_ref.shape[-1]

    # attn_gate: ReLU( [obj ; ques] @ Wg + bg ), concat folded into two matmuls.
    # Flatten (TB, O) into the MXU M dimension -> one big matmul per tile.
    z_obj = jnp.dot(obj.reshape(TB * O, F1), wg_obj_ref[...],
                    preferred_element_type=jnp.float32)                  # (TB*O, A)
    z_q = jnp.dot(ques, wg_q_ref[...],
                  preferred_element_type=jnp.float32)                    # (TB, A)
    z = z_obj.reshape(TB, O, A) + z_q[:, None, :] + bg_ref[...][None]    # (TB, O, A)
    gated = jnp.maximum(z, 0.0)
    # TODO(synk): dropout inside NonLinearity is identity (inference mode).

    # attn_layer: Linear(A -> 1) as a lane reduce; scores laid out (TB, O)
    # (batch on sublanes, objects on lanes).
    scores = jnp.sum(gated * wa_ref[...][None], axis=-1) + ba_ref[...]   # (TB, O)

    # Mask objects i >= num_obj[b]; finite large-negative value avoids NaNs
    # when num_obj == 0 (original module uses -inf).
    n = nobj_ref[...]                                                    # (TB, 1) i32
    idx = jax.lax.broadcasted_iota(jnp.int32, scores.shape, 1)
    scores = jnp.where(idx >= n, jnp.float32(-1e30), scores)

    # Softmax over the object (lane) axis.
    m = jnp.max(scores, axis=-1, keepdims=True)
    e = jnp.exp(scores - m)
    w = e * pl.reciprocal(jnp.sum(e, axis=-1, keepdims=True), approx=True)  # (TB, O)

    # Weighted sums over O as batched matmuls with lane-dense outputs.
    w3 = w[:, None, :]                                                   # (TB, 1, O)
    feat_out_ref[...] = jnp.einsum('tqo,tof->tqf', w3, obj,
                                   preferred_element_type=jnp.float32)   # (TB, 1, F1)
    mask_out_ref[...] = jnp.einsum('tqo,tos->tqs', w3, msk,
                                   preferred_element_type=jnp.float32)   # (TB, 1, HW)
    wt_out_ref[...] = w                                                  # (TB, O)


def topdown_attention(obj_feats, ques_emb, num_obj, obj_region_mask, params, *, tb=512):
    """obj_feats (B,O,F1) f32, ques_emb (B,F2) f32, num_obj (B,) i32,
    obj_region_mask (B,O,H,W) f32."""
    B, O, F1 = obj_feats.shape
    F2 = ques_emb.shape[-1]
    H, W = obj_region_mask.shape[-2:]
    HW = H * W
    A = params["wg_obj"].shape[-1]

    # Batch tile: TB batches per grid step (TB*O becomes the MXU M dim).
    TB = min(tb, B)
    n_tiles = pl.cdiv(B, TB)
    Bp = n_tiles * TB
    pad = Bp - B

    obj3 = obj_feats
    ques2 = ques_emb
    nobj2 = num_obj.reshape(B, 1).astype(jnp.int32)
    msk3 = obj_region_mask.reshape(B, O, HW)
    if pad:
        obj3 = jnp.pad(obj3, ((0, pad), (0, 0), (0, 0)))
        ques2 = jnp.pad(ques2, ((0, pad), (0, 0)))
        nobj2 = jnp.pad(nobj2, ((0, pad), (0, 0)))        # padded rows -> uniform weights, sliced off
        msk3 = jnp.pad(msk3, ((0, pad), (0, 0), (0, 0)))

    grid_spec = pltpu.PrefetchScalarGridSpec(
        num_scalar_prefetch=0,
        grid=(n_tiles,),
        in_specs=[
            pl.BlockSpec((TB, O, F1), lambda i: (i, 0, 0)),   # obj_feats
            pl.BlockSpec((TB, F2), lambda i: (i, 0)),         # ques_emb
            pl.BlockSpec((TB, O, HW), lambda i: (i, 0, 0)),   # region mask (flat)
            pl.BlockSpec((TB, 1), lambda i: (i, 0)),          # num_obj (vectorized)
            pl.BlockSpec((F1, A), lambda i: (0, 0)),          # Wg_obj (resident)
            pl.BlockSpec((F2, A), lambda i: (0, 0)),          # Wg_q
            pl.BlockSpec((1, A), lambda i: (0, 0)),           # bg
            pl.BlockSpec((1, A), lambda i: (0, 0)),           # wa
            pl.BlockSpec((1, 1), lambda i: (0, 0)),           # ba
        ],
        out_specs=[
            pl.BlockSpec((TB, 1, F1), lambda i: (i, 0, 0)),   # attended image feats
            pl.BlockSpec((TB, 1, HW), lambda i: (i, 0, 0)),   # predicted attention mask
            pl.BlockSpec((TB, O), lambda i: (i, 0)),          # attention weights (lane-dense)
        ],
    )

    out_shapes = (
        jax.ShapeDtypeStruct((Bp, 1, F1), jnp.float32),
        jax.ShapeDtypeStruct((Bp, 1, HW), jnp.float32),
        jax.ShapeDtypeStruct((Bp, O), jnp.float32),
    )

    feat, pmask, wt = pl.pallas_call(
        _topdown_attn_kernel,
        out_shape=out_shapes,
        grid_spec=grid_spec,
        compiler_params=pltpu.CompilerParams(
            dimension_semantics=("parallel",),        # batch tiles shard across TCs (v7x)
            vmem_limit_bytes=48 * 1024 * 1024,
        ),
    )(obj3, ques2, msk3, nobj2,
      params["wg_obj"], params["wg_q"], params["bg"],
      params["wa"], params["ba"])

    return (feat.reshape(Bp, F1)[:B],
            pmask.reshape(Bp, H, W)[:B],
            wt[:B])


def _weight_norm(v):
    # PyTorch weight_norm default dim=0 on Linear weight (out, in); g taken as 1.
    return v / jnp.linalg.norm(v, axis=1, keepdims=True)


def make_params(key, F1, F2, A):
    k1, k2, k3, k4 = jax.random.split(key, 4)
    v_gate = jax.random.normal(k1, (A, F1 + F2), jnp.float32)
    w_gate = _weight_norm(v_gate).T                       # (F1+F2, A)
    bg = 0.1 * jax.random.normal(k2, (1, A), jnp.float32)
    v_attn = jax.random.normal(k3, (1, A), jnp.float32)
    wa = _weight_norm(v_attn)                             # (1, A)
    ba = 0.1 * jax.random.normal(k4, (1, 1), jnp.float32)
    return {
        "wg_obj": w_gate[:F1],                            # (F1, A)
        "wg_q": w_gate[F1:],                              # (F2, A)
        "bg": bg,
        "wa": wa,
        "ba": ba,
    }


def reference(obj_feats, ques_emb, num_obj, obj_region_mask, params):
    B, O, F1 = obj_feats.shape
    H, W = obj_region_mask.shape[-2:]
    x = jnp.concatenate(
        [obj_feats, jnp.broadcast_to(ques_emb[:, None, :], (B, O, ques_emb.shape[-1]))], axis=2)
    Wg = jnp.concatenate([params["wg_obj"], params["wg_q"]], axis=0)
    gated = jax.nn.relu(x @ Wg + params["bg"])
    scores = jnp.sum(gated * params["wa"], axis=-1) + params["ba"][0, 0]     # (B, O)
    mask = jnp.arange(O)[None, :] >= num_obj[:, None]
    scores = jnp.where(mask, -jnp.inf, scores)
    attn_wt = jax.nn.softmax(scores, axis=1)
    feat = jnp.einsum("bo,bof->bf", attn_wt, obj_feats)
    pmask = jnp.einsum("bo,bos->bs", attn_wt,
                       obj_region_mask.reshape(B, O, -1)).reshape(B, H, W)
    return feat, pmask, attn_wt


if __name__ == "__main__":
    B = 2          # batch
    O = 8          # max_num_objs
    F1 = 32        # n_img_feats (obj feature dim)
    F2 = 32        # n_ques_emb
    A = 32         # n_attn
    H = W = 16     # attention-mask spatial size

    key = jax.random.PRNGKey(0)
    k_obj, k_q, k_m, k_p = jax.random.split(key, 4)
    obj_feats = jax.random.normal(k_obj, (B, O, F1), jnp.float32)
    ques_emb = jax.random.normal(k_q, (B, F2), jnp.float32)
    obj_region_mask = jax.random.uniform(k_m, (B, O, H, W), jnp.float32)
    num_obj = jnp.array([5, 8], dtype=jnp.int32)
    params = make_params(k_p, F1, F2, A)

    feat, pmask, attn_wt = topdown_attention(
        obj_feats, ques_emb, num_obj, obj_region_mask, params)
    jax.block_until_ready((feat, pmask, attn_wt))

    r_feat, r_pmask, r_wt = reference(
        obj_feats, ques_emb, num_obj, obj_region_mask, params)
    np.testing.assert_allclose(np.asarray(feat), np.asarray(r_feat), rtol=5e-2, atol=5e-2)
    np.testing.assert_allclose(np.asarray(pmask), np.asarray(r_pmask), rtol=5e-2, atol=5e-2)
    np.testing.assert_allclose(np.asarray(attn_wt), np.asarray(r_wt), rtol=5e-2, atol=5e-2)

    print("KERNEL_OK")
</pallas_src>

<mosaic_0001>
module attributes {stable_mosaic.version = 11 : i64} {
  func.func @_topdown_attn_kernel(%arg0: i32, %arg1: memref<2x8x32xf32, #tpu.memory_space<vmem>>, %arg2: memref<2x32xf32, #tpu.memory_space<vmem>>, %arg3: memref<2x8x256xf32, #tpu.memory_space<vmem>>, %arg4: memref<2x1xi32, #tpu.memory_space<vmem>>, %arg5: memref<32x32xf32, #tpu.memory_space<vmem>>, %arg6: memref<32x32xf32, #tpu.memory_space<vmem>>, %arg7: memref<1x32xf32, #tpu.memory_space<vmem>>, %arg8: memref<1x32xf32, #tpu.memory_space<vmem>>, %arg9: memref<1x1xf32, #tpu.memory_space<vmem>>, %arg10: memref<2x1x32xf32, #tpu.memory_space<vmem>>, %arg11: memref<2x1x256xf32, #tpu.memory_space<vmem>>, %arg12: memref<2x8xf32, #tpu.memory_space<vmem>>) attributes {dimension_semantics = [#tpu.dimension_semantics<parallel>], iteration_bounds = array<i64: 1>, scalar_prefetch = 0 : i64, scratch_operands = 0 : i64, tpu.core_type = #tpu.core_type<tc>, window_params = [{transform_indices = @transform_0, window_bounds = array<i64: 2, 8, 32>}, {transform_indices = @transform_1, window_bounds = array<i64: 2, 32>}, {transform_indices = @transform_2, window_bounds = array<i64: 2, 8, 256>}, {transform_indices = @transform_3, window_bounds = array<i64: 2, 1>}, {pipeline_mode = #tpu.pipeline_mode<synchronous>, transform_indices = @transform_4, window_bounds = array<i64: 32, 32>}, {pipeline_mode = #tpu.pipeline_mode<synchronous>, transform_indices = @transform_5, window_bounds = array<i64: 32, 32>}, {pipeline_mode = #tpu.pipeline_mode<synchronous>, transform_indices = @transform_6, window_bounds = array<i64: 1, 32>}, {pipeline_mode = #tpu.pipeline_mode<synchronous>, transform_indices = @transform_7, window_bounds = array<i64: 1, 32>}, {pipeline_mode = #tpu.pipeline_mode<synchronous>, transform_indices = @transform_8, window_bounds = array<i64: 1, 1>}, {transform_indices = @transform_9, window_bounds = array<i64: 2, 1, 32>}, {transform_indices = @transform_10, window_bounds = array<i64: 2, 1, 256>}, {transform_indices = @transform_11, window_bounds = array<i64: 2, 8>}]} {
    %c0 = arith.constant 0 : index
    %c0_0 = arith.constant 0 : index
    %c0_1 = arith.constant 0 : index
    %0 = vector.load %arg1[%c0, %c0_0, %c0_1] : memref<2x8x32xf32, #tpu.memory_space<vmem>>, vector<2x8x32xf32>
    %c0_2 = arith.constant 0 : index
    %c0_3 = arith.constant 0 : index
    %c0_4 = arith.constant 0 : index
    %1 = vector.load %arg3[%c0_2, %c0_3, %c0_4] : memref<2x8x256xf32, #tpu.memory_space<vmem>>, vector<2x8x256xf32>
    %c0_5 = arith.constant 0 : index
    %c0_6 = arith.constant 0 : index
    %2 = vector.load %arg2[%c0_5, %c0_6] : memref<2x32xf32, #tpu.memory_space<vmem>>, vector<2x32xf32>
    %3 = vector.shape_cast %0 : vector<2x8x32xf32> to vector<16x32xf32>
    %c0_7 = arith.constant 0 : index
    %c0_8 = arith.constant 0 : index
    %4 = vector.load %arg5[%c0_7, %c0_8] : memref<32x32xf32, #tpu.memory_space<vmem>>, vector<32x32xf32>
    %cst = arith.constant dense<0.000000e+00> : vector<16x32xf32>
    %5 = tpu.matmul %3, %4, %cst {dimension_numbers = #tpu.dot_dimension_numbers<[1], [0], [0], [1], [0, 0, 1, 1], [], []>} : vector<16x32xf32>, vector<32x32xf32>, vector<16x32xf32> -> vector<16x32xf32>
    %c0_9 = arith.constant 0 : index
    %c0_10 = arith.constant 0 : index
    %6 = vector.load %arg6[%c0_9, %c0_10] : memref<32x32xf32, #tpu.memory_space<vmem>>, vector<32x32xf32>
    %cst_11 = arith.constant dense<0.000000e+00> : vector<2x32xf32>
    %7 = tpu.matmul %2, %6, %cst_11 {dimension_numbers = #tpu.dot_dimension_numbers<[1], [0], [0], [1], [0, 0, 1, 1], [], []>} : vector<2x32xf32>, vector<32x32xf32>, vector<2x32xf32> -> vector<2x32xf32>
    %8 = vector.shape_cast %5 : vector<16x32xf32> to vector<2x8x32xf32>
    %9 = vector.shape_cast %7 : vector<2x32xf32> to vector<2x1x32xf32>
    %10 = vector.broadcast %9 : vector<2x1x32xf32> to vector<2x8x32xf32>
    %11 = arith.addf %8, %10 : vector<2x8x32xf32>
    %c0_12 = arith.constant 0 : index
    %c0_13 = arith.constant 0 : index
    %12 = vector.load %arg7[%c0_12, %c0_13] : memref<1x32xf32, #tpu.memory_space<vmem>>, vector<1x32xf32>
    %13 = vector.shape_cast %12 : vector<1x32xf32> to vector<1x1x32xf32>
    %14 = vector.broadcast %13 : vector<1x1x32xf32> to vector<2x8x32xf32>
    %15 = arith.addf %11, %14 : vector<2x8x32xf32>
    %cst_14 = arith.constant 0.000000e+00 : f32
    %16 = vector.broadcast %cst_14 : f32 to vector<2x8x32xf32>
    %17 = arith.maximumf %15, %16 : vector<2x8x32xf32>
    %c0_15 = arith.constant 0 : index
    %c0_16 = arith.constant 0 : index
    %18 = vector.load %arg8[%c0_15, %c0_16] : memref<1x32xf32, #tpu.memory_space<vmem>>, vector<1x32xf32>
    %19 = vector.shape_cast %18 : vector<1x32xf32> to vector<1x1x32xf32>
    %20 = vector.broadcast %19 : vector<1x1x32xf32> to vector<2x8x32xf32>
    %21 = arith.mulf %17, %20 : vector<2x8x32xf32>
    %cst_17 = arith.constant dense<0.000000e+00> : vector<2x8xf32>
    %22 = vector.multi_reduction <add>, %21, %cst_17 [2] : vector<2x8x32xf32> to vector<2x8xf32>
    %c0_18 = arith.constant 0 : index
    %c0_19 = arith.constant 0 : index
    %23 = vector.load %arg9[%c0_18, %c0_19] : memref<1x1xf32, #tpu.memory_space<vmem>>, vector<1x1xf32>
    %24 = vector.broadcast %23 : vector<1x1xf32> to vector<2x8xf32>
    %25 = arith.addf %22, %24 : vector<2x8xf32>
    %c0_20 = arith.constant 0 : index
    %c0_21 = arith.constant 0 : index
    %26 = vector.load %arg4[%c0_20, %c0_21] : memref<2x1xi32, #tpu.memory_space<vmem>>, vector<2x1xi32>
    %27 = tpu.iota {dimensions = array<i32: 1>} : vector<2x8xi32>
    %28 = vector.broadcast %26 : vector<2x1xi32> to vector<2x8xi32>
    %29 = arith.cmpi sge, %27, %28 : vector<2x8xi32>
    %cst_22 = arith.constant -1.000000e+30 : f32
    %30 = vector.broadcast %cst_22 : f32 to vector<2x8xf32>
    %31 = arith.select %29, %30, %25 : vector<2x8xi1>, vector<2x8xf32>
    %cst_23 = arith.constant dense<0xFF800000> : vector<2xf32>
    %32 = vector.multi_reduction <maximumf>, %31, %cst_23 [1] : vector<2x8xf32> to vector<2xf32>
    %33 = vector.shape_cast %32 : vector<2xf32> to vector<2x1xf32>
    %34 = vector.broadcast %33 : vector<2x1xf32> to vector<2x8xf32>
    %35 = arith.subf %31, %34 : vector<2x8xf32>
    %36 = math.exp %35 : vector<2x8xf32>
    %cst_24 = arith.constant dense<0.000000e+00> : vector<2xf32>
    %37 = vector.multi_reduction <add>, %36, %cst_24 [1] : vector<2x8xf32> to vector<2xf32>
    %38 = vector.shape_cast %37 : vector<2xf32> to vector<2x1xf32>
    %39 = tpu.reciprocal %38 {approx = true} : vector<2x1xf32> -> vector<2x1xf32>
    %40 = vector.broadcast %39 : vector<2x1xf32> to vector<2x8xf32>
    %41 = arith.mulf %36, %40 : vector<2x8xf32>
    %42 = vector.shape_cast %41 : vector<2x8xf32> to vector<2x1x8xf32>
    "tpu.trace_start"() <{level = 10 : i32, message = "tqo,tof->tqf"}> : () -> ()
    %cst_25 = arith.constant dense<0.000000e+00> : vector<2x1x32xf32>
    %43 = tpu.matmul %42, %0, %cst_25 {dimension_numbers = #tpu.dot_dimension_numbers<[2], [1], [1], [2], [0, 0, 0, 1, 1, 2], [0], [0]>} : vector<2x1x8xf32>, vector<2x8x32xf32>, vector<2x1x32xf32> -> vector<2x1x32xf32>
    "tpu.trace_stop"() : () -> ()
    %c0_26 = arith.constant 0 : index
    %c0_27 = arith.constant 0 : index
    %c0_28 = arith.constant 0 : index
    %44 = vector.load %arg10[%c0_26, %c0_27, %c0_28] : memref<2x1x32xf32, #tpu.memory_space<vmem>>, vector<2x1x32xf32>
    tpu.vector_store %arg10[%c0_26, %c0_27, %c0_28], %43 {strides = array<i32>} : memref<2x1x32xf32, #tpu.memory_space<vmem>>, vector<2x1x32xf32>,
    "tpu.trace_start"() <{level = 10 : i32, message = "tqo,tos->tqs"}> : () -> ()
    %cst_29 = arith.constant dense<0.000000e+00> : vector<2x1x256xf32>
    %45 = tpu.matmul %42, %1, %cst_29 {dimension_numbers = #tpu.dot_dimension_numbers<[2], [1], [1], [2], [0, 0, 0, 1, 1, 2], [0], [0]>} : vector<2x1x8xf32>, vector<2x8x256xf32>, vector<2x1x256xf32> -> vector<2x1x256xf32>
    "tpu.trace_stop"() : () -> ()
    %c0_30 = arith.constant 0 : index
    %c0_31 = arith.constant 0 : index
    %c0_32 = arith.constant 0 : index
    %46 = vector.load %arg11[%c0_30, %c0_31, %c0_32] : memref<2x1x256xf32, #tpu.memory_space<vmem>>, vector<2x1x256xf32>
    tpu.vector_store %arg11[%c0_30, %c0_31, %c0_32], %45 {strides = array<i32>} : memref<2x1x256xf32, #tpu.memory_space<vmem>>, vector<2x1x256xf32>,
    %c0_33 = arith.constant 0 : index
    %c0_34 = arith.constant 0 : index
    %47 = vector.load %arg12[%c0_33, %c0_34] : memref<2x8xf32, #tpu.memory_space<vmem>>, vector<2x8xf32>
    tpu.vector_store %arg12[%c0_33, %c0_34], %41 {strides = array<i32>} : memref<2x8xf32, #tpu.memory_space<vmem>>, vector<2x8xf32>,
    return
  }
  func.func @transform_0(%arg0: i32) -> (i32, i32, i32) {
    %c0_i32 = arith.constant 0 : i32
    %c0_i32_0 = arith.constant 0 : i32
    %c0_i32_1 = arith.constant 0 : i32
    return %arg0, %c0_i32, %c0_i32_0 : i32, i32, i32
  }
  func.func @transform_1(%arg0: i32) -> (i32, i32) {
    %c0_i32 = arith.constant 0 : i32
    %c0_i32_0 = arith.constant 0 : i32
    return %arg0, %c0_i32 : i32, i32
  }
  func.func @transform_2(%arg0: i32) -> (i32, i32, i32) {
    %c0_i32 = arith.constant 0 : i32
    %c0_i32_0 = arith.constant 0 : i32
    %c0_i32_1 = arith.constant 0 : i32
    return %arg0, %c0_i32, %c0_i32_0 : i32, i32, i32
  }
  func.func @transform_3(%arg0: i32) -> (i32, i32) {
    %c0_i32 = arith.constant 0 : i32
    %c0_i32_0 = arith.constant 0 : i32
    return %arg0, %c0_i32 : i32, i32
  }
  func.func @transform_4(%arg0: i32) -> (i32, i32) {
    %c0_i32 = arith.constant 0 : i32
    %c0_i32_0 = arith.constant 0 : i32
    %c0_i32_1 = arith.constant 0 : i32
    return %c0_i32, %c0_i32_0 : i32, i32
  }
  func.func @transform_5(%arg0: i32) -> (i32, i32) {
    %c0_i32 = arith.constant 0 : i32
    %c0_i32_0 = arith.constant 0 : i32
    %c0_i32_1 = arith.constant 0 : i32
    return %c0_i32, %c0_i32_0 : i32, i32
  }
  func.func @transform_6(%arg0: i32) -> (i32, i32) {
    %c0_i32 = arith.constant 0 : i32
    %c0_i32_0 = arith.constant 0 : i32
    %c0_i32_1 = arith.constant 0 : i32
    return %c0_i32, %c0_i32_0 : i32, i32
  }
  func.func @transform_7(%arg0: i32) -> (i32, i32) {
    %c0_i32 = arith.constant 0 : i32
    %c0_i32_0 = arith.constant 0 : i32
    %c0_i32_1 = arith.constant 0 : i32
    return %c0_i32, %c0_i32_0 : i32, i32
  }
  func.func @transform_8(%arg0: i32) -> (i32, i32) {
    %c0_i32 = arith.constant 0 : i32
    %c0_i32_0 = arith.constant 0 : i32
    %c0_i32_1 = arith.constant 0 : i32
    return %c0_i32, %c0_i32_0 : i32, i32
  }
  func.func @transform_9(%arg0: i32) -> (i32, i32, i32) {
    %c0_i32 = arith.constant 0 : i32
    %c0_i32_0 = arith.constant 0 : i32
    %c0_i32_1 = arith.constant 0 : i32
    return %arg0, %c0_i32, %c0_i32_0 : i32, i32, i32
  }
  func.func @transform_10(%arg0: i32) -> (i32, i32, i32) {
    %c0_i32 = arith.constant 0 : i32
    %c0_i32_0 = arith.constant 0 : i32
    %c0_i32_1 = arith.constant 0 : i32
    return %arg0, %c0_i32, %c0_i32_0 : i32, i32, i32
  }
  func.func @transform_11(%arg0: i32) -> (i32, i32) {
    %c0_i32 = arith.constant 0 : i32
    %c0_i32_0 = arith.constant 0 : i32
    return %arg0, %c0_i32 : i32, i32
  }
}

</mosaic_0001>

<llo_original>
// kernel: tpu_custom_call.1
$region0: #{tpu_custom_call.1}
  #allocation0 [shape = 'u32[]', space=smem, size = 0x4, offset = 0x4, fixed_abs, tag = 'smem constant byte address 0x4 - core index']
  #allocation1 [shape = 'u32[144,128]{1,0:T(1,128)}', space=vmem, size = 0x12000, scoped, tag = 'internal scratch']
  #allocation2 [shape = 'f32[1,1]{1,0:T(1,128)S(1)}', space=vmem, size = 0x200, scoped, tag = 'scoped memory for tpu_custom_call.1']
  %s0 = inlined_call_operand.hbm [shape: f32[2,8,32], index: 0, kind: input, shape index: {}]
  %s1 = inlined_call_operand.vmem [shape: f32[2,32], index: 1, kind: input, shape index: {}]
  %s2 = inlined_call_operand.hbm [shape: f32[2,8,256], index: 2, kind: input, shape index: {}]
  %s3 = inlined_call_operand.vmem [shape: s32[2,1], index: 3, kind: input, shape index: {}]
  %s4 = inlined_call_operand.hbm [shape: f32[32,32], index: 4, kind: input, shape index: {}]
  %s5 = inlined_call_operand.hbm [shape: f32[32,32], index: 5, kind: input, shape index: {}]
  %s6 = inlined_call_operand.vmem [shape: f32[1,32], index: 6, kind: input, shape index: {}]
  %s7 = inlined_call_operand.vmem [shape: f32[1,32], index: 7, kind: input, shape index: {}]
  %s8 = inlined_call_operand.<no memory space> [shape: f32[1,1], index: 8, kind: input, shape index: {}]
  %s9 = inlined_call_operand.hbm [shape: f32[2,1,32], index: 9, kind: output, shape index: {0}]
  %s10 = inlined_call_operand.hbm [shape: f32[2,1,256], index: 10, kind: output, shape index: {1}]
  %s11 = inlined_call_operand.hbm [shape: f32[2,8], index: 11, kind: output, shape index: {2}]
  %12 = xla_tuple %s9, %s10, %s11
  %s13 = sld [smem:[#allocation0]]
  $region78: #{tpu_custom_call.1} parent=0
    _
  %s15 = ssub.s32 1, %s13
  %s16 = scalar_select 0, %s15, %s13
  %v17 = vstv %s8
  %18 = vst [vmem:[#allocation2] sm:$0x1] %v17
  $region1: #{tpu_custom_call.1} parent=0
    #allocation3 [shape = 'u8[8192]{0}', space=vmem, size = 0x2000, scoped, tag = 'input window, operand 0, single buffered']
    #allocation4 [shape = 's32[1]{0}', space=sflag, size = 0x4, scoped, tag = 'scoped memory for tpu_custom_call.1']
    #allocation5 [shape = 's32[1]{0}', space=sflag, size = 0x4, scoped, tag = 'scoped memory for tpu_custom_call.1']
    #allocation6 [shape = 'u8[16384]{0}', space=vmem, size = 0x4000, scoped, tag = 'input window, operand 2, single buffered']
    #allocation7 [shape = 's32[1]{0}', space=sflag, size = 0x4, scoped, tag = 'scoped memory for tpu_custom_call.1']
    #allocation8 [shape = 'u8[16384]{0}', space=vmem, size = 0x4000, scoped, tag = 'input window, operand 4, single buffered']
    #allocation9 [shape = 'u8[16384]{0}', space=vmem, size = 0x4000, scoped, tag = 'input window, operand 5, single buffered']
    #allocation10 [shape = 's32[1]{0}', space=sflag, size = 0x4, scoped, tag = 'scoped memory for tpu_custom_call.1']
    #allocation11 [shape = 'u8[1024]{0}', space=vmem, size = 0x400, scoped, tag = 'output window, operand 0, single buffered']
    #allocation12 [shape = 'u8[2048]{0}', space=vmem, size = 0x800, scoped, tag = 'output window, operand 1, single buffered']
    #allocation13 [shape = 's32[1]{0}', space=sflag, size = 0x4, scoped, tag = 'scoped memory for tpu_custom_call.1']
    #allocation14 [shape = 'u8[1024]{0}', space=vmem, size = 0x400, scoped, tag = 'output window, operand 2, single buffered']
    %19 = vsyncpa [#allocation4], 0
    %20 = vsyncpa [#allocation7], 0
    %21 = vsyncpa [#allocation10], 0
    %22 = vsyncpa [#allocation5], 0
    %23 = vsyncpa [#allocation13], 0
    // Predicated region
    $region2: #{tpu_custom_call.1} parent=1 // pred_check
      _
    $region3: #{tpu_custom_call.1} parent=1 // pred_check_branch
      %25 = sbr.rel (0) target = $region5
    $region4: #{tpu_custom_call.1} parent=1 // pred_region
      %s27 = ssub.s32 256, 256
      %28 = vsyncadd [#allocation4], %s27
      %s29 = sshll.u32 [#allocation3], 4
      %s30 = int_to_ptr.vmem [resolvable:$true] %s29
      %35 = dma.hbm_to_vmem [thread:$0]  %s0, 256, %s30, [#allocation4], 128, 128, 8
    $region5: #{tpu_custom_call.1} parent=1 // pred_fallthru
      _
    // Predicated region
    $region6: #{tpu_custom_call.1} parent=1 // pred_check
      _
    $region7: #{tpu_custom_call.1} parent=1 // pred_check_branch
      %37 = sbr.rel (0) target = $region9
    $region8: #{tpu_custom_call.1} parent=1 // pred_region
      _
    $region9: #{tpu_custom_call.1} parent=1 // pred_fallthru
      _
    // Predicated region
    $region10: #{tpu_custom_call.1} parent=1 // pred_check
      _
    $region11: #{tpu_custom_call.1} parent=1 // pred_check_branch
      %39 = sbr.rel (0) target = $region13
    $region12: #{tpu_custom_call.1} parent=1 // pred_region
      %s41 = ssub.s32 512, 512
      %42 = vsyncadd [#allocation7], %s41
      %s43 = sshll.u32 [#allocation6], 4
      %s44 = int_to_ptr.vmem [resolvable:$true] %s43
      %49 = dma.hbm_to_vmem [thread:$0]  %s2, 512, %s44, [#allocation7], 256, 256, 16
    $region13: #{tpu_custom_call.1} parent=1 // pred_fallthru
      _
    // Predicated region
    $region14: #{tpu_custom_call.1} parent=1 // pred_check
      _
    $region15: #{tpu_custom_call.1} parent=1 // pred_check_branch
      %51 = sbr.rel (0) target = $region17
    $region16: #{tpu_custom_call.1} parent=1 // pred_region
      _
    $region17: #{tpu_custom_call.1} parent=1 // pred_fallthru
      _
    // Predicated region
    $region18: #{tpu_custom_call.1} parent=1 // pred_check
      _
    $region19: #{tpu_custom_call.1} parent=1 // pred_check_branch
      %53 = sbr.rel (0) target = $region21
    $region20: #{tpu_custom_call.1} parent=1 // pred_region
      %s55 = ssub.s32 512, 512
      %56 = vsyncadd [#allocation7], %s55
      %s57 = sshll.u32 [#allocation8], 4
      %s58 = int_to_ptr.vmem [resolvable:$true] %s57
      %63 = dma.hbm_to_vmem [thread:$0]  %s4, 512, %s58, [#allocation7], 128, 128, 8
    $region21: #{tpu_custom_call.1} parent=1 // pred_fallthru
      _
    // Predicated region
    $region22: #{tpu_custom_call.1} parent=1 // pred_check
      _
    $region23: #{tpu_custom_call.1} parent=1 // pred_check_branch
      %65 = sbr.rel (0) target = $region25
    $region24: #{tpu_custom_call.1} parent=1 // pred_region
      %s67 = ssub.s32 512, 512
      %68 = vsyncadd [#allocation10], %s67
      %s69 = sshll.u32 [#allocation9], 4
      %s70 = int_to_ptr.vmem [resolvable:$true] %s69
      %75 = dma.hbm_to_vmem [thread:$0]  %s5, 512, %s70, [#allocation10], 128, 128, 8
    $region25: #{tpu_custom_call.1} parent=1 // pred_fallthru
      _
    // Predicated region
    $region26: #{tpu_custom_call.1} parent=1 // pred_check
      _
    $region27: #{tpu_custom_call.1} parent=1 // pred_check_branch
      %77 = sbr.rel (0) target = $region29
    $region28: #{tpu_custom_call.1} parent=1 // pred_region
      _
    $region29: #{tpu_custom_call.1} parent=1 // pred_fallthru
      _
    // Predicated region
    $region30: #{tpu_custom_call.1} parent=1 // pred_check
      _
    $region31: #{tpu_custom_call.1} parent=1 // pred_check_branch
      %79 = sbr.rel (0) target = $region33
    $region32: #{tpu_custom_call.1} parent=1 // pred_region
      _
    $region33: #{tpu_custom_call.1} parent=1 // pred_fallthru
      _
    // Predicated region
    $region34: #{tpu_custom_call.1} parent=1 // pred_check
      _
    $region35: #{tpu_custom_call.1} parent=1 // pred_check_branch
      %81 = sbr.rel (0) target = $region37
    $region36: #{tpu_custom_call.1} parent=1 // pred_region
      _
    $region37: #{tpu_custom_call.1} parent=1 // pred_fallthru
      _
    // Predicated region
    $region38: #{tpu_custom_call.1} parent=1 // pred_check
      _
    $region39: #{tpu_custom_call.1} parent=1 // pred_check_branch
      %83 = sbr.rel (0) target = $region41
    $region40: #{tpu_custom_call.1} parent=1 // pred_region
      %84 = dma.done [#allocation4], 256
    $region41: #{tpu_custom_call.1} parent=1 // pred_fallthru
      _
    // Predicated region
    $region42: #{tpu_custom_call.1} parent=1 // pred_check
      _
    $region43: #{tpu_custom_call.1} parent=1 // pred_check_branch
      %86 = sbr.rel (0) target = $region45
    $region44: #{tpu_custom_call.1} parent=1 // pred_region
      %87 = dma.done [#allocation7], 512
    $region45: #{tpu_custom_call.1} parent=1 // pred_fallthru
      _
    // Predicated region
    $region46: #{tpu_custom_call.1} parent=1 // pred_check
      _
    $region47: #{tpu_custom_call.1} parent=1 // pred_check_branch
      %89 = sbr.rel (0) target = $region49
    $region48: #{tpu_custom_call.1} parent=1 // pred_region
      %90 = dma.done [#allocation7], 512
    $region49: #{tpu_custom_call.1} parent=1 // pred_fallthru
      _
    // Predicated region
    $region50: #{tpu_custom_call.1} parent=1 // pred_check
      _
    $region51: #{tpu_custom_call.1} parent=1 // pred_check_branch
      %92 = sbr.rel (0) target = $region53
    $region52: #{tpu_custom_call.1} parent=1 // pred_region
      %93 = dma.done [#allocation10], 512
    $region53: #{tpu_custom_call.1} parent=1 // pred_fallthru
      _
    %v94 = vld [vmem:[#allocation3] sm:$0xff]
    %v95 = vld [vmem:[#allocation3 + $0x8] sm:$0xff]
    %v96 = vld [vmem:[#allocation6] sm:$0xff]
    %v97 = vld [vmem:[#allocation6 + $0x8] sm:$0xff]
    %v98 = vld [vmem:[#allocation6 + $0x10] sm:$0xff]
    %v99 = vld [vmem:[#allocation6 + $0x18] sm:$0xff]
    %v100 = vld [vmem:[%s1] sm:$0x3]
    %v101 = vld [vmem:[#allocation8] sm:$0xff]
    %v102 = vld [vmem:[#allocation8 + $0x8] sm:$0xff]
    %v103 = vld [vmem:[#allocation8 + $0x10] sm:$0xff]
    %v104 = vld [vmem:[#allocation8 + $0x18] sm:$0xff]
    %vm105 = vcmask 261120
    %v107 = vsel %vm105, %v94, 0
    %v110 = vsel %vm105, %v95, 0
    %112 = vmatprep.subr.mxu0 0.0
    %113 = vmatpush1.msra.mxu0 %v101
    %114 = vmatprep.subr.mxu0 0.0
    %115 = vmatpush1.msra.mxu0 %v102
    %116 = vmatprep.subr.mxu0 0.0
    %117 = vmatpush1.msra.mxu0 %v103
    %118 = vmatprep.subr.mxu0 0.0
    %119 = vmatpush1.msra.mxu0 %v104
    %120 = vmatprep.subr.mxu0 0.0
    %121 = vmatpush1.msra.mxu0 0.0
    %122 = vmatprep.subr.mxu0 0.0
    %123 = vmatpush1.msra.mxu0 0.0
    %124 = vmatprep.subr.mxu0 0.0
    %125 = vmatpush1.msra.mxu0 0.0
    %126 = vmatprep.subr.mxu0 0.0
    %127 = vmatpush1.msra.mxu0 0.0
    %128 = vmatprep.subr.mxu0 0.0
    %129 = vmatpush1.msra.mxu0 0.0
    %130 = vmatprep.subr.mxu0 0.0
    %131 = vmatpush1.msra.mxu0 0.0
    %132 = vmatprep.subr.mxu0 0.0
    %133 = vmatpush1.msra.mxu0 0.0
    %134 = vmatprep.subr.mxu0 0.0
    %135 = vmatpush1.msra.mxu0 0.0
    %136 = vmatprep.subr.mxu0 0.0
    %137 = vmatpush1.msra.mxu0 0.0
    %138 = vmatprep.subr.mxu0 0.0
    %139 = vmatpush1.msra.mxu0 0.0
    %140 = vmatprep.subr.mxu0 0.0
    %141 = vmatpush1.msra.mxu0 0.0
    %142 = vmatprep.subr.mxu0 0.0
    %143 = vmatpush1.msra.mxu0 0.0
    %144 = vmatprep.subr.mxu0 0.0
    %145 = vmatpush1.msra.mxu0 0.0
    %146 = vmatprep.subr.mxu0 0.0
    %147 = vmatpush1.msra.mxu0 0.0
    %148 = vmatprep.subr.mxu0 0.0
    %149 = vmatpush1.msra.mxu0 0.0
    %150 = vmatprep.subr.mxu0 0.0
    %151 = vmatpush1.msra.mxu0 0.0
    %152 = vmatprep.subr.mxu0 0.0
    %153 = vmatpush1.msra.mxu0 0.0
    %154 = vmatprep.subr.mxu0 0.0
    %155 = vmatpush1.msra.mxu0 0.0
    %156 = vmatprep.subr.mxu0 0.0
    %157 = vmatpush1.msra.mxu0 0.0
    %158 = vmatprep.subr.mxu0 0.0
    %159 = vmatpush1.msra.mxu0 0.0
    %160 = vmatprep.subr.mxu0 0.0
    %161 = vmatpush1.msra.mxu0 0.0
    %162 = vmatprep.subr.mxu0 0.0
    %163 = vmatpush1.msra.mxu0 0.0
    %164 = vmatprep.subr.mxu0 0.0
    %165 = vmatpush1.msra.mxu0 0.0
    %166 = vmatprep.subr.mxu0 0.0
    %167 = vmatpush1.msra.mxu0 0.0
    %168 = vmatprep.subr.mxu0 0.0
    %169 = vmatpush1.msra.mxu0 0.0
    %170 = vmatprep.subr.mxu0 0.0
    %171 = vmatpush1.msra.mxu0 0.0
    %172 = vmatprep.subr.mxu0 0.0
    %173 = vmatpush1.msra.mxu0 0.0
    %174 = vmatprep.subr.mxu0 0.0
    %175 = vmatpush1.msra.mxu0 0.0
    %176 = vmatprep.mubr.f32.mxu0 0.0
    %177 = vmatmul.mubr.f32.gmra.mrb[0].mxu0 %v107
    %v178 = vpop.f32.mrb[0].mxu0
    %v179 = vadd.f32 0.0, %v178
    %v180 = vpop.f32.mrb[0].mxu0
    %181 = vmatprep.mubr.f32.mxu0 0.0
    %182 = vmatmul.mubr.f32.gmra.mrb[0].mxu0 %v110
    %v183 = vpop.f32.mrb[0].mxu0
    %v184 = vadd.f32 0.0, %v183
    %v185 = vpop.f32.mrb[0].mxu0
    %186 = vdwg.mxu0
    %v187 = vld [vmem:[#allocation9] sm:$0xff]
    %v188 = vld [vmem:[#allocation9 + $0x8] sm:$0xff]
    %v189 = vld [vmem:[#allocation9 + $0x10] sm:$0xff]
    %v190 = vld [vmem:[#allocation9 + $0x18] sm:$0xff]
    %v192 = vsel %vm105, %v100, 0
    %194 = vmatprep.subr.mxu0 0.0
    %195 = vmatpush1.msra.mxu0 %v187
    %196 = vmatprep.subr.mxu0 0.0
    %197 = vmatpush1.msra.mxu0 %v188
    %198 = vmatprep.subr.mxu0 0.0
    %199 = vmatpush1.msra.mxu0 %v189
    %200 = vmatprep.subr.mxu0 0.0
    %201 = vmatpush1.msra.mxu0 %v190
    %202 = vmatprep.subr.mxu0 0.0
    %203 = vmatpush1.msra.mxu0 0.0
    %204 = vmatprep.subr.mxu0 0.0
    %205 = vmatpush1.msra.mxu0 0.0
    %206 = vmatprep.subr.mxu0 0.0
    %207 = vmatpush1.msra.mxu0 0.0
    %208 = vmatprep.subr.mxu0 0.0
    %209 = vmatpush1.msra.mxu0 0.0
    %210 = vmatprep.subr.mxu0 0.0
    %211 = vmatpush1.msra.mxu0 0.0
    %212 = vmatprep.subr.mxu0 0.0
    %213 = vmatpush1.msra.mxu0 0.0
    %214 = vmatprep.subr.mxu0 0.0
    %215 = vmatpush1.msra.mxu0 0.0
    %216 = vmatprep.subr.mxu0 0.0
    %217 = vmatpush1.msra.mxu0 0.0
    %218 = vmatprep.subr.mxu0 0.0
    %219 = vmatpush1.msra.mxu0 0.0
    %220 = vmatprep.subr.mxu0 0.0
    %221 = vmatpush1.msra.mxu0 0.0
    %222 = vmatprep.subr.mxu0 0.0
    %223 = vmatpush1.msra.mxu0 0.0
    %224 = vmatprep.subr.mxu0 0.0
    %225 = vmatpush1.msra.mxu0 0.0
    %226 = vmatprep.subr.mxu0 0.0
    %227 = vmatpush1.msra.mxu0 0.0
    %228 = vmatprep.subr.mxu0 0.0
    %229 = vmatpush1.msra.mxu0 0.0
    %230 = vmatprep.subr.mxu0 0.0
    %231 = vmatpush1.msra.mxu0 0.0
    %232 = vmatprep.subr.mxu0 0.0
    %233 = vmatpush1.msra.mxu0 0.0
    %234 = vmatprep.subr.mxu0 0.0
    %235 = vmatpush1.msra.mxu0 0.0
    %236 = vmatprep.subr.mxu0 0.0
    %237 = vmatpush1.msra.mxu0 0.0
    %238 = vmatprep.subr.mxu0 0.0
    %239 = vmatpush1.msra.mxu0 0.0
    %240 = vmatprep.subr.mxu0 0.0
    %241 = vmatpush1.msra.mxu0 0.0
    %242 = vmatprep.subr.mxu0 0.0
    %243 = vmatpush1.msra.mxu0 0.0
    %244 = vmatprep.subr.mxu0 0.0
    %245 = vmatpush1.msra.mxu0 0.0
    %246 = vmatprep.subr.mxu0 0.0
    %247 = vmatpush1.msra.mxu0 0.0
    %248 = vmatprep.subr.mxu0 0.0
    %249 = vmatpush1.msra.mxu0 0.0
    %250 = vmatprep.subr.mxu0 0.0
    %251 = vmatpush1.msra.mxu0 0.0
    %252 = vmatprep.subr.mxu0 0.0
    %253 = vmatpush1.msra.mxu0 0.0
    %254 = vmatprep.subr.mxu0 0.0
    %255 = vmatpush1.msra.mxu0 0.0
    %256 = vmatprep.subr.mxu0 0.0
    %257 = vmatpush1.msra.mxu0 0.0
    %258 = vmatprep.mubr.f32.mxu0 0.0
    %259 = vmatmul.mubr.f32.gmra.mrb[0].mxu0 %v192
    %v260 = vpop.f32.mrb[0].mxu0
    %v261 = vadd.f32 0.0, %v260
    %v262 = vpop.f32.mrb[0].mxu0
    %263 = vdwg.mxu0
    %v266 = vunpack.c.l.s4 1966171168
    %v267 = vunpack.c.0.s8 %v266
    %v268 = vlaneseq
    %v269 = vshrl.u32 %v268, 7
    %v270 = vsub.s32 %v267, %v269
    %v271 = vrot.slane %v261, %v270
    %v272 = vcombine.high %v271, %v271
    %v274 = vunpack.c.l.s4 1966171168
    %v275 = vunpack.c.0.s8 %v274
    %v276 = vlaneseq
    %v277 = vshrl.u32 %v276, 7
    %v278 = vsub.s32 %v275, %v277
    %v279 = vrot.slane %v271, %v278
    %v281 = vunpack.c.l.s4 1966171168
    %v282 = vunpack.c.0.s8 %v281
    %v283 = vlaneseq
    %v284 = vshrl.u32 %v283, 7
    %v285 = vsub.s32 %v282, %v284
    %v286 = vrot.slane %v272, %v285
    %v287 = vlaneseq
    %v288 = vshrl.u32 %v287, 7
    %v289 = vsub.s32 0, %v288
    %v290 = vrot.slane %v279, %v289
    %v291 = vlaneseq
    %v292 = vshrl.u32 %v291, 7
    %v293 = vsub.s32 0, %v292
    %v294 = vrot.slane %v286, %v293
    %v297 = vadd.f32 %v179, %v290
    %v298 = vadd.f32 %v184, %v294
    %v299 = vld [vmem:[%s6] sm:$0x1]
    %v301 = vlaneseq
    %v302 = vshrl.u32 %v301, 7
    %v303 = vsub.s32 0, %v302
    %v304 = vrot.slane %v299, %v303
    %v306 = vadd.f32 %v297, %v304
    %v307 = vadd.f32 %v298, %v304
    %v308 = vmax.f32 %v306, 0.0
    %v309 = vmax.f32 %v307, 0.0
    %v310 = vld [vmem:[%s7] sm:$0x1]
    %v312 = vlaneseq
    %v313 = vshrl.u32 %v312, 7
    %v314 = vsub.s32 0, %v313
    %v315 = vrot.slane %v310, %v314
    %v317 = vmul.f32 %v308, %v315
    %v318 = vmul.f32 %v309, %v315
    %v319 = vsel %vm105, %v317, 0.0
    %320 = vadd.xlane.f32.xlu0 %v319
    %v321 = vpop.xlane.xlu0 %320
    %v322 = vsel %vm105, %v318, 0.0
    %323 = vadd.xlane.f32.xlu0 %v322
    %v324 = vpop.xlane.xlu0 %323
    %v325 = vld [vmem:[#allocation2] sm:$0x1]
    %v327 = vlaneseq
    %v328 = vshrl.u32 %v327, 7
    %v329 = vsub.s32 0, %v328
    %v330 = vrot.slane %v325, %v329
    %331 = vset.pattern.permute.xlu0 0
    %332 = vperm.xlu0 %331, %v330
    %v333 = vpop.permute.xlu0 %332
    %v335 = vadd.f32 %v321, %v333
    %v336 = vadd.f32 %v324, %v333
    %v337 = vld [vmem:[%s3] sm:$0x3]
    %v338 = vlaneseq
    %v339 = vand.u32 %v338, 127
    %340 = vset.pattern.permute.xlu0 0
    %341 = vperm.xlu0 %340, %v337
    %v342 = vpop.permute.xlu0 %341
    %vm343 = vcmp.ge.s32.totalorder %v339, %v342
    %v346 = vlaneseq
    %v347 = vshrl.u32 %v346, 7
    %v348 = vsub.s32 %v339, %v347
    %v349 = vrot.slane %v335, %v348
    %v350 = vlaneseq
    %v351 = vshrl.u32 %v350, 7
    %v352 = vsub.s32 %v339, %v351
    %v353 = vrot.slane %v336, %v352
    %vm354 = vcmask 1041409
    %v355 = vsel %vm354, %v353, %v349
    %v357 = vsel %vm343, -1e+30, %v355
    %vm358 = vcmask 58368
    %v359 = vsel %vm358, %v357, -inf
    %360 = vmax.xlane.f32.xlu0 %v359
    %v361 = vpop.xlane.xlu0 %360
    %v362 = vsub.f32 %v357, %v361
    %v363 = vmul.f32 %v362, 1.442695
    %v364 = vpow.pop %v363
    %v365 = vsel %vm358, %v364, 0.0
    %366 = vadd.xlane.f32.xlu0 %v365
    %v367 = vpop.xlane.xlu0 %366
    %v368 = vrcp.pop %v367
    %v369 = vmul.f32 %v364, %v368
    %v372 = vunpack.c.l.s4 1966171168
    %v373 = vunpack.c.0.s8 %v372
    %v374 = vlaneseq
    %v375 = vshrl.u32 %v374, 7
    %v376 = vsub.s32 %v373, %v375
    %v377 = vrot.slane %v369, %v376
    %v378 = vcombine.high %v377, %v377
    %v380 = vunpack.c.l.s4 1966171168
    %v381 = vunpack.c.0.s8 %v380
    %v382 = vlaneseq
    %v383 = vshrl.u32 %v382, 7
    %v384 = vsub.s32 %v381, %v383
    %v385 = vrot.slane %v377, %v384
    %v387 = vunpack.c.l.s4 1966171168
    %v388 = vunpack.c.0.s8 %v387
    %v389 = vlaneseq
    %v390 = vshrl.u32 %v389, 7
    %v391 = vsub.s32 %v388, %v390
    %v392 = vrot.slane %v378, %v391
    %vm393 = vcmask 64512
    %v394 = vsel %vm393, %v385, 0
    %396 = vmatprep.subr.mxu0 0.0
    %397 = vmatpush1.msra.mxu0 %v94
    %398 = vmatprep.subr.mxu0 0.0
    %399 = vmatpush1.msra.mxu0 0.0
    %400 = vmatprep.subr.mxu0 0.0
    %401 = vmatpush1.msra.mxu0 0.0
    %402 = vmatprep.subr.mxu0 0.0
    %403 = vmatpush1.msra.mxu0 0.0
    %404 = vmatprep.subr.mxu0 0.0
    %405 = vmatpush1.msra.mxu0 0.0
    %406 = vmatprep.subr.mxu0 0.0
    %407 = vmatpush1.msra.mxu0 0.0
    %408 = vmatprep.subr.mxu0 0.0
    %409 = vmatpush1.msra.mxu0 0.0
    %410 = vmatprep.subr.mxu0 0.0
    %411 = vmatpush1.msra.mxu0 0.0
    %412 = vmatprep.subr.mxu0 0.0
    %413 = vmatpush1.msra.mxu0 0.0
    %414 = vmatprep.subr.mxu0 0.0
    %415 = vmatpush1.msra.mxu0 0.0
    %416 = vmatprep.subr.mxu0 0.0
    %417 = vmatpush1.msra.mxu0 0.0
    %418 = vmatprep.subr.mxu0 0.0
    %419 = vmatpush1.msra.mxu0 0.0
    %420 = vmatprep.subr.mxu0 0.0
    %421 = vmatpush1.msra.mxu0 0.0
    %422 = vmatprep.subr.mxu0 0.0
    %423 = vmatpush1.msra.mxu0 0.0
    %424 = vmatprep.subr.mxu0 0.0
    %425 = vmatpush1.msra.mxu0 0.0
    %426 = vmatprep.subr.mxu0 0.0
    %427 = vmatpush1.msra.mxu0 0.0
    %428 = vmatprep.subr.mxu0 0.0
    %429 = vmatpush1.msra.mxu0 0.0
    %430 = vmatprep.subr.mxu0 0.0
    %431 = vmatpush1.msra.mxu0 0.0
    %432 = vmatprep.subr.mxu0 0.0
    %433 = vmatpush1.msra.mxu0 0.0
    %434 = vmatprep.subr.mxu0 0.0
    %435 = vmatpush1.msra.mxu0 0.0
    %436 = vmatprep.subr.mxu0 0.0
    %437 = vmatpush1.msra.mxu0 0.0
    %438 = vmatprep.subr.mxu0 0.0
    %439 = vmatpush1.msra.mxu0 0.0
    %440 = vmatprep.subr.mxu0 0.0
    %441 = vmatpush1.msra.mxu0 0.0
    %442 = vmatprep.subr.mxu0 0.0
    %443 = vmatpush1.msra.mxu0 0.0
    %444 = vmatprep.subr.mxu0 0.0
    %445 = vmatpush1.msra.mxu0 0.0
    %446 = vmatprep.subr.mxu0 0.0
    %447 = vmatpush1.msra.mxu0 0.0
    %448 = vmatprep.subr.mxu0 0.0
    %449 = vmatpush1.msra.mxu0 0.0
    %450 = vmatprep.subr.mxu0 0.0
    %451 = vmatpush1.msra.mxu0 0.0
    %452 = vmatprep.subr.mxu0 0.0
    %453 = vmatpush1.msra.mxu0 0.0
    %454 = vmatprep.subr.mxu0 0.0
    %455 = vmatpush1.msra.mxu0 0.0
    %456 = vmatprep.subr.mxu0 0.0
    %457 = vmatpush1.msra.mxu0 0.0
    %458 = vmatprep.subr.mxu0 0.0
    %459 = vmatpush1.msra.mxu0 0.0
    %460 = vmatprep.mubr.f32.mxu0 0.0
    %461 = vmatmul.mubr.f32.gmra.mrb[0].mxu0 %v394
    %v462 = vpop.f32.mrb[0].mxu0
    %v463 = vadd.f32 0.0, %v462
    %v464 = vpop.f32.mrb[0].mxu0
    %465 = vdwg.mxu0
    %v466 = vsel %vm393, %v392, 0
    %468 = vmatprep.subr.mxu0 0.0
    %469 = vmatpush1.msra.mxu0 %v95
    %470 = vmatprep.subr.mxu0 0.0
    %471 = vmatpush1.msra.mxu0 0.0
    %472 = vmatprep.subr.mxu0 0.0
    %473 = vmatpush1.msra.mxu0 0.0
    %474 = vmatprep.subr.mxu0 0.0
    %475 = vmatpush1.msra.mxu0 0.0
    %476 = vmatprep.subr.mxu0 0.0
    %477 = vmatpush1.msra.mxu0 0.0
    %478 = vmatprep.subr.mxu0 0.0
    %479 = vmatpush1.msra.mxu0 0.0
    %480 = vmatprep.subr.mxu0 0.0
    %481 = vmatpush1.msra.mxu0 0.0
    %482 = vmatprep.subr.mxu0 0.0
    %483 = vmatpush1.msra.mxu0 0.0
    %484 = vmatprep.subr.mxu0 0.0
    %485 = vmatpush1.msra.mxu0 0.0
    %486 = vmatprep.subr.mxu0 0.0
    %487 = vmatpush1.msra.mxu0 0.0
    %488 = vmatprep.subr.mxu0 0.0
    %489 = vmatpush1.msra.mxu0 0.0
    %490 = vmatprep.subr.mxu0 0.0
    %491 = vmatpush1.msra.mxu0 0.0
    %492 = vmatprep.subr.mxu0 0.0
    %493 = vmatpush1.msra.mxu0 0.0
    %494 = vmatprep.subr.mxu0 0.0
    %495 = vmatpush1.msra.mxu0 0.0
    %496 = vmatprep.subr.mxu0 0.0
    %497 = vmatpush1.msra.mxu0 0.0
    %498 = vmatprep.subr.mxu0 0.0
    %499 = vmatpush1.msra.mxu0 0.0
    %500 = vmatprep.subr.mxu0 0.0
    %501 = vmatpush1.msra.mxu0 0.0
    %502 = vmatprep.subr.mxu0 0.0
    %503 = vmatpush1.msra.mxu0 0.0
    %504 = vmatprep.subr.mxu0 0.0
    %505 = vmatpush1.msra.mxu0 0.0
    %506 = vmatprep.subr.mxu0 0.0
    %507 = vmatpush1.msra.mxu0 0.0
    %508 = vmatprep.subr.mxu0 0.0
    %509 = vmatpush1.msra.mxu0 0.0
    %510 = vmatprep.subr.mxu0 0.0
    %511 = vmatpush1.msra.mxu0 0.0
    %512 = vmatprep.subr.mxu0 0.0
    %513 = vmatpush1.msra.mxu0 0.0
    %514 = vmatprep.subr.mxu0 0.0
    %515 = vmatpush1.msra.mxu0 0.0
    %516 = vmatprep.subr.mxu0 0.0
    %517 = vmatpush1.msra.mxu0 0.0
    %518 = vmatprep.subr.mxu0 0.0
    %519 = vmatpush1.msra.mxu0 0.0
    %520 = vmatprep.subr.mxu0 0.0
    %521 = vmatpush1.msra.mxu0 0.0
    %522 = vmatprep.subr.mxu0 0.0
    %523 = vmatpush1.msra.mxu0 0.0
    %524 = vmatprep.subr.mxu0 0.0
    %525 = vmatpush1.msra.mxu0 0.0
    %526 = vmatprep.subr.mxu0 0.0
    %527 = vmatpush1.msra.mxu0 0.0
    %528 = vmatprep.subr.mxu0 0.0
    %529 = vmatpush1.msra.mxu0 0.0
    %530 = vmatprep.subr.mxu0 0.0
    %531 = vmatpush1.msra.mxu0 0.0
    %532 = vmatprep.mubr.f32.mxu0 0.0
    %533 = vmatmul.mubr.f32.gmra.mrb[0].mxu0 %v466
    %v534 = vpop.f32.mrb[0].mxu0
    %v535 = vadd.f32 0.0, %v534
    %v536 = vpop.f32.mrb[0].mxu0
    %537 = vdwg.mxu0
    %vm538 = vcmask 253952
    %539 = vst.msk [vmem:[#allocation11] sm:$0x1] %vm538, %v463
    %540 = vst.msk [vmem:[#allocation11 + $0x1] sm:$0x1] %vm538, %v535
    %541 = vmatprep.subr.mxu0 %v97
    %542 = vmatpush1.msra.mxu0 %v96
    %543 = vmatprep.subr.mxu0 0.0
    %544 = vmatpush1.msra.mxu0 0.0
    %545 = vmatprep.subr.mxu0 0.0
    %546 = vmatpush1.msra.mxu0 0.0
    %547 = vmatprep.subr.mxu0 0.0
    %548 = vmatpush1.msra.mxu0 0.0
    %549 = vmatprep.subr.mxu0 0.0
    %550 = vmatpush1.msra.mxu0 0.0
    %551 = vmatprep.subr.mxu0 0.0
    %552 = vmatpush1.msra.mxu0 0.0
    %553 = vmatprep.subr.mxu0 0.0
    %554 = vmatpush1.msra.mxu0 0.0
    %555 = vmatprep.subr.mxu0 0.0
    %556 = vmatpush1.msra.mxu0 0.0
    %557 = vmatprep.subr.mxu0 0.0
    %558 = vmatpush1.msra.mxu0 0.0
    %559 = vmatprep.subr.mxu0 0.0
    %560 = vmatpush1.msra.mxu0 0.0
    %561 = vmatprep.subr.mxu0 0.0
    %562 = vmatpush1.msra.mxu0 0.0
    %563 = vmatprep.subr.mxu0 0.0
    %564 = vmatpush1.msra.mxu0 0.0
    %565 = vmatprep.subr.mxu0 0.0
    %566 = vmatpush1.msra.mxu0 0.0
    %567 = vmatprep.subr.mxu0 0.0
    %568 = vmatpush1.msra.mxu0 0.0
    %569 = vmatprep.subr.mxu0 0.0
    %570 = vmatpush1.msra.mxu0 0.0
    %571 = vmatprep.subr.mxu0 0.0
    %572 = vmatpush1.msra.mxu0 0.0
    %573 = vmatprep.subr.mxu0 0.0
    %574 = vmatpush1.msra.mxu0 0.0
    %575 = vmatprep.subr.mxu0 0.0
    %576 = vmatpush1.msra.mxu0 0.0
    %577 = vmatprep.subr.mxu0 0.0
    %578 = vmatpush1.msra.mxu0 0.0
    %579 = vmatprep.subr.mxu0 0.0
    %580 = vmatpush1.msra.mxu0 0.0
    %581 = vmatprep.subr.mxu0 0.0
    %582 = vmatpush1.msra.mxu0 0.0
    %583 = vmatprep.subr.mxu0 0.0
    %584 = vmatpush1.msra.mxu0 0.0
    %585 = vmatprep.subr.mxu0 0.0
    %586 = vmatpush1.msra.mxu0 0.0
    %587 = vmatprep.subr.mxu0 0.0
    %588 = vmatpush1.msra.mxu0 0.0
    %589 = vmatprep.subr.mxu0 0.0
    %590 = vmatpush1.msra.mxu0 0.0
    %591 = vmatprep.subr.mxu0 0.0
    %592 = vmatpush1.msra.mxu0 0.0
    %593 = vmatprep.subr.mxu0 0.0
    %594 = vmatpush1.msra.mxu0 0.0
    %595 = vmatprep.subr.mxu0 0.0
    %596 = vmatpush1.msra.mxu0 0.0
    %597 = vmatprep.subr.mxu0 0.0
    %598 = vmatpush1.msra.mxu0 0.0
    %599 = vmatprep.subr.mxu0 0.0
    %600 = vmatpush1.msra.mxu0 0.0
    %601 = vmatprep.subr.mxu0 0.0
    %602 = vmatpush1.msra.mxu0 0.0
    %603 = vmatprep.subr.mxu0 0.0
    %604 = vmatpush1.msra.mxu0 0.0
    %605 = vmatprep.mubr.f32.mxu0 0.0
    %606 = vmatmul.mubr.f32.gmra.mrb[0].mxu0 %v394
    %v607 = vpop.f32.mrb[0].mxu0
    %v608 = vadd.f32 0.0, %v607
    %v609 = vpop.f32.mrb[0].mxu0
    %v610 = vadd.f32 0.0, %v609
    %611 = vdwg.mxu0
    %612 = vmatprep.subr.mxu0 %v99
    %613 = vmatpush1.msra.mxu0 %v98
    %614 = vmatprep.subr.mxu0 0.0
    %615 = vmatpush1.msra.mxu0 0.0
    %616 = vmatprep.subr.mxu0 0.0
    %617 = vmatpush1.msra.mxu0 0.0
    %618 = vmatprep.subr.mxu0 0.0
    %619 = vmatpush1.msra.mxu0 0.0
    %620 = vmatprep.subr.mxu0 0.0
    %621 = vmatpush1.msra.mxu0 0.0
    %622 = vmatprep.subr.mxu0 0.0
    %623 = vmatpush1.msra.mxu0 0.0
    %624 = vmatprep.subr.mxu0 0.0
    %625 = vmatpush1.msra.mxu0 0.0
    %626 = vmatprep.subr.mxu0 0.0
    %627 = vmatpush1.msra.mxu0 0.0
    %628 = vmatprep.subr.mxu0 0.0
    %629 = vmatpush1.msra.mxu0 0.0
    %630 = vmatprep.subr.mxu0 0.0
    %631 = vmatpush1.msra.mxu0 0.0
    %632 = vmatprep.subr.mxu0 0.0
    %633 = vmatpush1.msra.mxu0 0.0
    %634 = vmatprep.subr.mxu0 0.0
    %635 = vmatpush1.msra.mxu0 0.0
    %636 = vmatprep.subr.mxu0 0.0
    %637 = vmatpush1.msra.mxu0 0.0
    %638 = vmatprep.subr.mxu0 0.0
    %639 = vmatpush1.msra.mxu0 0.0
    %640 = vmatprep.subr.mxu0 0.0
    %641 = vmatpush1.msra.mxu0 0.0
    %642 = vmatprep.subr.mxu0 0.0
    %643 = vmatpush1.msra.mxu0 0.0
    %644 = vmatprep.subr.mxu0 0.0
    %645 = vmatpush1.msra.mxu0 0.0
    %646 = vmatprep.subr.mxu0 0.0
    %647 = vmatpush1.msra.mxu0 0.0
    %648 = vmatprep.subr.mxu0 0.0
    %649 = vmatpush1.msra.mxu0 0.0
    %650 = vmatprep.subr.mxu0 0.0
    %651 = vmatpush1.msra.mxu0 0.0
    %652 = vmatprep.subr.mxu0 0.0
    %653 = vmatpush1.msra.mxu0 0.0
    %654 = vmatprep.subr.mxu0 0.0
    %655 = vmatpush1.msra.mxu0 0.0
    %656 = vmatprep.subr.mxu0 0.0
    %657 = vmatpush1.msra.mxu0 0.0
    %658 = vmatprep.subr.mxu0 0.0
    %659 = vmatpush1.msra.mxu0 0.0
    %660 = vmatprep.subr.mxu0 0.0
    %661 = vmatpush1.msra.mxu0 0.0
    %662 = vmatprep.subr.mxu0 0.0
    %663 = vmatpush1.msra.mxu0 0.0
    %664 = vmatprep.subr.mxu0 0.0
    %665 = vmatpush1.msra.mxu0 0.0
    %666 = vmatprep.subr.mxu0 0.0
    %667 = vmatpush1.msra.mxu0 0.0
    %668 = vmatprep.subr.mxu0 0.0
    %669 = vmatpush1.msra.mxu0 0.0
    %670 = vmatprep.subr.mxu0 0.0
    %671 = vmatpush1.msra.mxu0 0.0
    %672 = vmatprep.subr.mxu0 0.0
    %673 = vmatpush1.msra.mxu0 0.0
    %674 = vmatprep.subr.mxu0 0.0
    %675 = vmatpush1.msra.mxu0 0.0
    %676 = vmatprep.mubr.f32.mxu0 0.0
    %677 = vmatmul.mubr.f32.gmra.mrb[0].mxu0 %v466
    %v678 = vpop.f32.mrb[0].mxu0
    %v679 = vadd.f32 0.0, %v678
    %v680 = vpop.f32.mrb[0].mxu0
    %v681 = vadd.f32 0.0, %v680
    %682 = vdwg.mxu0
    %v687 = vcombine.low %v608, %v610
    %v689 = vunpack.c.l.s4 1966171168
    %v690 = vunpack.c.0.s8 %v689
    %v691 = vlaneseq
    %v692 = vshrl.u32 %v691, 7
    %v693 = vsub.s32 %v690, %v692
    %v694 = vrot.slane %v687, %v693
    %v696 = vunpack.c.l.s4 1966171168
    %v697 = vunpack.c.0.s8 %v696
    %v698 = vlaneseq
    %v699 = vshrl.u32 %v698, 7
    %v700 = vsub.s32 %v697, %v699
    %v701 = vrot.slane %v694, %v700
    %v702 = vcombine.low %v679, %v681
    %v704 = vunpack.c.l.s4 1966171168
    %v705 = vunpack.c.0.s8 %v704
    %v706 = vlaneseq
    %v707 = vshrl.u32 %v706, 7
    %v708 = vsub.s32 %v705, %v707
    %v709 = vrot.slane %v702, %v708
    %v711 = vunpack.c.l.s4 1966171168
    %v712 = vunpack.c.0.s8 %v711
    %v713 = vlaneseq
    %v714 = vshrl.u32 %v713, 7
    %v715 = vsub.s32 %v712, %v714
    %v716 = vrot.slane %v709, %v715
    %v719 = vlaneseq
    %vm720 = vcmp.ge.s32.totalorder %v719, 0
    %vm721 = vcmp.lt.s32.totalorder %v719, 256
    %vm722 = vmand %vm720, %vm721
    %723 = vst.msk [vmem:[#allocation12] sm:$0x3] %vm722, %v701
    %724 = vst.msk [vmem:[#allocation12 + $0x2] sm:$0x3] %vm722, %v716
    %725 = vst.msk [vmem:[#allocation14] sm:$0x3] %vm358, %v369
    // Predicated region
    $region54: #{tpu_custom_call.1} parent=1 // pred_check
      _
    $region55: #{tpu_custom_call.1} parent=1 // pred_check_branch
      %727 = sbr.rel (0) target = $region57
    $region56: #{tpu_custom_call.1} parent=1 // pred_region
      %s729 = ssub.s32 32, 32
      %730 = vsyncadd [#allocation5], %s729
      %s731 = sshll.u32 [#allocation11], 4
      %s732 = int_to_ptr.vmem [resolvable:$true] %s731
      %737 = dma.vmem_to_hbm [thread:$0]  %s732, 32, %s9, [#allocation5], 16, 16, 1
    $region57: #{tpu_custom_call.1} parent=1 // pred_fallthru
      _
    // Predicated region
    $region58: #{tpu_custom_call.1} parent=1 // pred_check
      _
    $region59: #{tpu_custom_call.1} parent=1 // pred_check_branch
      %739 = sbr.rel (0) target = $region61
    $region60: #{tpu_custom_call.1} parent=1 // pred_region
      %s741 = ssub.s32 64, 64
      %742 = vsyncadd [#allocation13], %s741
      %s743 = sshll.u32 [#allocation12], 4
      %s744 = int_to_ptr.vmem [resolvable:$true] %s743
      %749 = dma.vmem_to_hbm [thread:$0]  %s744, 64, %s10, [#allocation13], 32, 32, 2
    $region61: #{tpu_custom_call.1} parent=1 // pred_fallthru
      _
    // Predicated region
    $region62: #{tpu_custom_call.1} parent=1 // pred_check
      _
    $region63: #{tpu_custom_call.1} parent=1 // pred_check_branch
      %751 = sbr.rel (0) target = $region65
    $region64: #{tpu_custom_call.1} parent=1 // pred_region
      %s753 = ssub.s32 32, 32
      %754 = vsyncadd [#allocation13], %s753
      %s756 = sshll.u32 [#allocation14], 4
      %s757 = int_to_ptr.vmem [resolvable:$true] %s756
      %759 = dma.vmem_to_hbm [thread:$0]  %s757, 32, %s11, [#allocation13]
    $region65: #{tpu_custom_call.1} parent=1 // pred_fallthru
      _
    // Predicated region
    $region66: #{tpu_custom_call.1} parent=1 // pred_check
      _
    $region67: #{tpu_custom_call.1} parent=1 // pred_check_branch
      %761 = sbr.rel (0) target = $region69
    $region68: #{tpu_custom_call.1} parent=1 // pred_region
      %762 = dma.done [#allocation5], 32
    $region69: #{tpu_custom_call.1} parent=1 // pred_fallthru
      _
    // Predicated region
    $region70: #{tpu_custom_call.1} parent=1 // pred_check
      _
    $region71: #{tpu_custom_call.1} parent=1 // pred_check_branch
      %764 = sbr.rel (0) target = $region73
    $region72: #{tpu_custom_call.1} parent=1 // pred_region
      %765 = dma.done [#allocation13], 64
    $region73: #{tpu_custom_call.1} parent=1 // pred_fallthru
      _
    // Predicated region
    $region74: #{tpu_custom_call.1} parent=1 // pred_check
      _
    $region75: #{tpu_custom_call.1} parent=1 // pred_check_branch
      %767 = sbr.rel (0) target = $region77
    $region76: #{tpu_custom_call.1} parent=1 // pred_region
      %768 = dma.done [#allocation13], 32
    $region77: #{tpu_custom_call.1} parent=1 // pred_fallthru
      _
    %769 = vsyncpa [#allocation4], 1
    %770 = vsyncpa [#allocation7], 1
    %771 = vsyncpa [#allocation10], 1
    %772 = vsyncpa [#allocation5], 1
    %773 = vsyncpa [#allocation13], 1

</llo_original>
